<compile_context>
chip_gen: v5e
topology: v5e:2x2
jax: 0.10.0
libtpu: 0.0.40
codegen_flags: <defaults>
</compile_context>

<pallas_src>
import functools

import jax
import jax.numpy as jnp
from jax import lax
from jax.experimental import pallas as pl
from jax.experimental.pallas import tpu as pltpu

LANE = 128


def _device_kind():
    try:
        return jax.devices()[0].device_kind.lower()
    except Exception:
        return ""


def _dice_sums_kernel(pred_ref, tgt_ref, out_ref, *, num_classes, rows,
                      tiles_per_split, n_tiles, tail_valid, needs_mask,
                      has_skip, compute_dtype, approx_recip):
    s_id = pl.program_id(0)
    j = pl.program_id(2)
    t = s_id * tiles_per_split + j          # global (unclamped) tile index

    @pl.when(j == 0)
    def _():
        out_ref[...] = jnp.zeros_like(out_ref)

    def reduce_rows(x):                     # (rows, 128) -> (8, 128), always f32
        return jnp.sum(x.astype(jnp.float32).reshape(rows // 8, 8, LANE), axis=0)

    def accumulate(masked):
        p = pred_ref[0]                     # (C, rows, 128) logits (f32 or bf16)
        if p.dtype != compute_dtype:
            p = p.astype(compute_dtype)
        t_ids = tgt_ref[0]                  # (rows, 128) class ids
        if t_ids.dtype != jnp.int32:
            t_ids = t_ids.astype(jnp.int32)

        if masked:
            # Only ever executed for the single last real tile: static threshold.
            row_idx = lax.broadcasted_iota(jnp.int32, (rows, LANE), 0)
            lane_idx = lax.broadcasted_iota(jnp.int32, (rows, LANE), 1)
            valid = (row_idx * LANE + lane_idx) < tail_valid          # (rows, 128)
            # Mask BEFORE exp: the partial-block tail may hold arbitrary stale data.
            p = jnp.where(valid[None], p, 0.0)

        # softmax over the (un-tiled) class axis: pure VPU/EUP work on (rows,128) slabs.
        m = jnp.max(p, axis=0, keepdims=True)
        e = jnp.exp(p - m)
        denom = jnp.sum(e, axis=0, keepdims=True)
        if approx_recip and denom.dtype == jnp.float32:
            sm = e * pl.reciprocal(denom, approx=True)                # EUP slot
        else:
            sm = e / denom

        for cc in range(num_classes):
            oh_c = t_ids == cc                                        # bool (rows,128)
            sm_c = sm[cc]
            if masked:
                oh_c = jnp.logical_and(oh_c, valid)
                psum_c = jnp.where(valid, sm_c, 0.0)
            else:
                psum_c = sm_c
            inter_c = jnp.where(oh_c, sm_c, 0.0)                      # select, no mul
            out_ref[0, 0, cc] += reduce_rows(inter_c)                 # intersection
            out_ref[0, 1, cc] += reduce_rows(psum_c)                  # pred sum
            out_ref[0, 2, cc] += reduce_rows(oh_c.astype(jnp.float32))  # target sum

    if needs_mask:
        # Masked path only on the last real tile; duplicates (t >= n_tiles, only
        # possible with has_skip) fall in neither branch and contribute nothing.
        @pl.when(t == n_tiles - 1)
        def _():
            accumulate(True)

        @pl.when(t < n_tiles - 1)
        def _():
            accumulate(False)
    elif has_skip:
        @pl.when(t < n_tiles)
        def _():
            accumulate(False)
    else:
        accumulate(False)


def soft_multi_dice_loss(pred, target, *, smooth=1e-5, classes=3,
                         ignore_classes_index=None, rows_per_tile=1024,
                         spatial_splits=None, compute_dtype=None,
                         approx_reciprocal=True):
    """pred: (b, c, d, h, w) float logits; target: (b, 1, d, h, w) integer class ids."""
    b, c, d, h, w = pred.shape
    assert c == classes
    n = d * h * w
    n_rows = -(-n // LANE)                                   # ceil(n / 128)

    # rows per grid step: multiple of 8, never larger than the row axis.
    rows_per_tile = max(8, (rows_per_tile // 8) * 8)
    rows = min(rows_per_tile, (n_rows // 8) * 8) if n_rows >= 8 else 8

    # stream pred as-is (f32 or bf16, upcast/compute in-kernel); no extra wrapper pass.
    if pred.dtype not in (jnp.float32, jnp.bfloat16):
        pred = pred.astype(jnp.float32)
    if pred.dtype == jnp.bfloat16 and rows % 16 != 0:        # packed-tile guard (tiny n)
        pred = pred.astype(jnp.float32)

    # VMEM budget check (double-buffered blocks + generous elementwise-temp headroom).
    def vmem_estimate(r):
        pred_blk = c * r * LANE * jnp.dtype(pred.dtype).itemsize
        tgt_blk = r * LANE * 4
        out_blk = 3 * c * 8 * LANE * 4
        return 2 * (pred_blk + tgt_blk + out_blk) + 6 * c * r * LANE * 4
    while rows > 8 and vmem_estimate(rows) > 28 * 1024 * 1024:
        rows = max(8, (rows // 2 // 8) * 8)

    # target: keep caller-provided 8-bit class ids narrow (1 B/voxel); else int32.
    tgt = target.reshape(b, n)
    if tgt.dtype in (jnp.int8, jnp.uint8) and rows % 32 == 0:
        pass
    elif tgt.dtype != jnp.int32:
        tgt = tgt.astype(jnp.int32)

    # Pad only up to the 128-lane boundary (and to >=8 rows for tiny inputs).  The
    # padded region is always inside the masked last tile, so its values are don't-care
    # for pred and safely excluded for target (class-0 padding never counted).
    pred_r = pred.reshape(b, c, n)
    n_rows_arr = max(n_rows, 8)
    n128 = n_rows_arr * LANE
    if n128 != n:
        pred_r = jnp.pad(pred_r, ((0, 0), (0, 0), (0, n128 - n)))
        tgt = jnp.pad(tgt, ((0, 0), (0, n128 - n)))
    pred_r = pred_r.reshape(b, c, n_rows_arr, LANE)
    tgt_r = tgt.reshape(b, n_rows_arr, LANE)

    n_tiles = -(-n_rows_arr // rows)

    # 2-way spatial split only helps dual-TensorCore parts (v7x) when b alone can't
    # keep both cores busy; pure overhead on single-core v5e/v6e.
    if spatial_splits is None:
        spatial_splits = 2 if (b % 2 == 1 and "v7" in _device_kind()) else 1
    spatial_splits = max(1, min(int(spatial_splits), n_tiles))
    tiles_per_split = -(-n_tiles // spatial_splits)
    has_skip = tiles_per_split * spatial_splits != n_tiles

    covered = n_tiles * rows * LANE
    needs_mask = covered != n
    tail_valid = n - (n_tiles - 1) * rows * LANE             # static, last-tile-local

    # bf16 elementwise compute only where the VPU/EUP support it (v6e/v7x) and the
    # producer already emits bf16; reductions/accumulators stay f32 regardless.
    if compute_dtype is None:
        kind = _device_kind()
        if pred.dtype == jnp.bfloat16 and ("v6" in kind or "v7" in kind):
            compute_dtype = jnp.bfloat16
        else:
            compute_dtype = jnp.float32
    compute_dtype = jnp.dtype(compute_dtype)

    def tile_index(s, j):
        t = s * tiles_per_split + j
        return jnp.minimum(t, n_tiles - 1) if has_skip else t

    kernel = functools.partial(
        _dice_sums_kernel, num_classes=c, rows=rows,
        tiles_per_split=tiles_per_split, n_tiles=n_tiles, tail_valid=tail_valid,
        needs_mask=needs_mask, has_skip=has_skip, compute_dtype=compute_dtype,
        approx_recip=approx_reciprocal)

    out = pl.pallas_call(
        kernel,
        out_shape=jax.ShapeDtypeStruct((spatial_splits * b, 3, c, 8, LANE),
                                       jnp.float32),
        grid_spec=pltpu.PrefetchScalarGridSpec(
            num_scalar_prefetch=0,
            grid=(spatial_splits, b, tiles_per_split),
            in_specs=[
                pl.BlockSpec((1, c, rows, LANE),
                             lambda s, i, j: (i, 0, tile_index(s, j), 0)),
                pl.BlockSpec((1, rows, LANE),
                             lambda s, i, j: (i, tile_index(s, j), 0)),
            ],
            out_specs=pl.BlockSpec((1, 3, c, 8, LANE),
                                   lambda s, i, j: (s * b + i, 0, 0, 0, 0)),
        ),
        compiler_params=pltpu.CompilerParams(
            dimension_semantics=("parallel", "parallel", "arbitrary"),
            vmem_limit_bytes=32 * 1024 * 1024),
    )(pred_r, tgt_r)

    # tiny glue: reduce the (8,128) partials and apply the dice formula / averaging.
    sums = out.reshape(spatial_splits, b, 3, c, 8 * LANE).sum(axis=(0, -1))  # (b, 3, c)
    inter_s, psum_s, tsum_s = sums[:, 0], sums[:, 1], sums[:, 2]
    dice = (2.0 * inter_s + smooth) / (psum_s + tsum_s + smooth)             # (b, c)
    loss_per_class = 1.0 - dice.sum(0) / b                                   # (c,)

    if ignore_classes_index is not None:
        keep = jnp.arange(c) != ignore_classes_index
        return jnp.sum(jnp.where(keep, loss_per_class, 0.0)) / (c - 1)
    return jnp.sum(loss_per_class) / c


def _reference_loss(pred, target, smooth=1e-5, classes=3, ignore_classes_index=None):
    b = pred.shape[0]
    p = jax.nn.softmax(pred.astype(jnp.float32), axis=1)
    tgt = target[:, 0]
    total = 0.0
    for cc in range(classes):
        if cc != ignore_classes_index:
            pc = p[:, cc].reshape(b, -1)
            tc = (tgt == cc).astype(jnp.float32).reshape(b, -1)
            inter = (pc * tc).sum(1)
            dice = (2 * inter + smooth) / (pc.sum(1) + tc.sum(1) + smooth)
            total += 1.0 - dice.sum() / b
    denom = classes - 1 if ignore_classes_index is not None else classes
    return total / denom


if __name__ == "__main__":
    key = jax.random.PRNGKey(0)
    k1, k2, k3, k4, k5, k6 = jax.random.split(key, 6)
    C = 3

    # 1) clean path: even batch, n divisible by rows*128 (no pad, no mask).
    B, D, H, W = 2, 8, 16, 16
    pred = jax.random.normal(k1, (B, C, D, H, W), dtype=jnp.float32)
    target = jax.random.randint(k2, (B, 1, D, H, W), 0, C, dtype=jnp.int32)
    loss = jax.block_until_ready(soft_multi_dice_loss(pred, target, classes=C))
    ref = _reference_loss(pred, target, classes=C)
    assert jnp.allclose(loss, ref, rtol=2e-3, atol=1e-5), (loss, ref)

    # 2) tiny ragged volume: pad-to-128 + in-kernel tail mask, odd batch.
    pred2 = jax.random.normal(k3, (1, C, 5, 7, 9), dtype=jnp.float32)
    target2 = jax.random.randint(k4, (1, 1, 5, 7, 9), 0, C, dtype=jnp.int32)
    loss2 = jax.block_until_ready(soft_multi_dice_loss(pred2, target2, classes=C))
    ref2 = _reference_loss(pred2, target2, classes=C)
    assert jnp.allclose(loss2, ref2, rtol=2e-3, atol=1e-5), (loss2, ref2)

    # 3) ragged last tile WITHOUT any wrapper pad (n % 128 == 0, n_rows % rows != 0):
    #    exercises the clamped partial-block DMA + last-tile-only mask.
    pred3 = jax.random.normal(k5, (2, C, 10, 16, 16), dtype=jnp.float32)
    target3 = jax.random.randint(k6, (2, 1, 10, 16, 16), 0, C, dtype=jnp.int32)
    loss3 = jax.block_until_ready(soft_multi_dice_loss(pred3, target3, classes=C))
    ref3 = _reference_loss(pred3, target3, classes=C)
    assert jnp.allclose(loss3, ref3, rtol=2e-3, atol=1e-5), (loss3, ref3)

    # 4) forced 2-way spatial split with a non-divisible tile count (clamp + skip path).
    pred4 = jax.random.normal(k1, (1, C, 24, 16, 16), dtype=jnp.float32)
    target4 = jax.random.randint(k2, (1, 1, 24, 16, 16), 0, C, dtype=jnp.int32)
    loss4 = jax.block_until_ready(
        soft_multi_dice_loss(pred4, target4, classes=C,
                             rows_per_tile=16, spatial_splits=2))
    ref4 = _reference_loss(pred4, target4, classes=C)
    assert jnp.allclose(loss4, ref4, rtol=2e-3, atol=1e-5), (loss4, ref4)

    # 5) ignore_classes_index path.
    loss5 = jax.block_until_ready(
        soft_multi_dice_loss(pred, target, classes=C, ignore_classes_index=1))
    ref5 = _reference_loss(pred, target, classes=C, ignore_classes_index=1)
    assert jnp.allclose(loss5, ref5, rtol=2e-3, atol=1e-5), (loss5, ref5)

    # 6) bf16 logits streamed narrow + uint8 targets streamed narrow.
    pred6 = jax.random.normal(k3, (2, C, 16, 16, 16), dtype=jnp.float32)
    target6 = jax.random.randint(k4, (2, 1, 16, 16, 16), 0, C).astype(jnp.uint8)
    pred6_bf16 = pred6.astype(jnp.bfloat16)
    loss6 = jax.block_until_ready(
        soft_multi_dice_loss(pred6_bf16, target6, classes=C))
    ref6 = _reference_loss(pred6_bf16.astype(jnp.float32), target6.astype(jnp.int32),
                           classes=C)
    assert jnp.allclose(loss6, ref6, rtol=2e-2, atol=5e-3), (loss6, ref6)

    print("KERNEL_OK")
</pallas_src>

<mosaic_0001>
module attributes {stable_mosaic.version = 11 : i64} {
  func.func @_dice_sums_kernel(%arg0: i32, %arg1: i32, %arg2: i32, %arg3: memref<1x3x16x128xf32, #tpu.memory_space<vmem>>, %arg4: memref<1x16x128xi32, #tpu.memory_space<vmem>>, %arg5: memref<1x3x3x8x128xf32, #tpu.memory_space<vmem>>) attributes {dimension_semantics = [#tpu.dimension_semantics<parallel>, #tpu.dimension_semantics<parallel>, #tpu.dimension_semantics<arbitrary>], iteration_bounds = array<i64: 1, 2, 1>, scalar_prefetch = 0 : i64, scratch_operands = 0 : i64, tpu.core_type = #tpu.core_type<tc>, window_params = [{transform_indices = @transform_0, window_bounds = array<i64: 1, 3, 16, 128>}, {transform_indices = @transform_1, window_bounds = array<i64: 1, 16, 128>}, {transform_indices = @transform_2, window_bounds = array<i64: 1, 3, 3, 8, 128>}]} {
    %c0_i32 = arith.constant 0 : i32
    %0 = arith.cmpi eq, %arg2, %c0_i32 : i32
    %1 = arith.extui %0 : i1 to i32
    %c0_i32_0 = arith.constant 0 : i32
    %2 = arith.cmpi ne, %1, %c0_i32_0 : i32
    scf.if %2 {
      %cst_109 = arith.constant 0.000000e+00 : f32
      %113 = vector.broadcast %cst_109 : f32 to vector<1x3x3x8x128xf32>
      %c0_110 = arith.constant 0 : index
      %c0_111 = arith.constant 0 : index
      %c0_112 = arith.constant 0 : index
      %c0_113 = arith.constant 0 : index
      %c0_114 = arith.constant 0 : index
      %114 = vector.load %arg5[%c0_110, %c0_111, %c0_112, %c0_113, %c0_114] : memref<1x3x3x8x128xf32, #tpu.memory_space<vmem>>, vector<1x3x3x8x128xf32>
      tpu.vector_store %arg5[%c0_110, %c0_111, %c0_112, %c0_113, %c0_114], %113 {strides = array<i32>} : memref<1x3x3x8x128xf32, #tpu.memory_space<vmem>>, vector<1x3x3x8x128xf32>,
    } else {
    }
    %c0 = arith.constant 0 : index
    %c0_1 = arith.constant 0 : index
    %c0_2 = arith.constant 0 : index
    %c0_3 = arith.constant 0 : index
    %3 = vector.load %arg3[%c0, %c0_1, %c0_2, %c0_3] : memref<1x3x16x128xf32, #tpu.memory_space<vmem>>, vector<1x3x16x128xf32>
    %4 = vector.shape_cast %3 : vector<1x3x16x128xf32> to vector<3x16x128xf32>
    %c0_4 = arith.constant 0 : index
    %c0_5 = arith.constant 0 : index
    %c0_6 = arith.constant 0 : index
    %5 = vector.load %arg4[%c0_4, %c0_5, %c0_6] : memref<1x16x128xi32, #tpu.memory_space<vmem>>, vector<1x16x128xi32>
    %6 = vector.shape_cast %5 : vector<1x16x128xi32> to vector<16x128xi32>
    %cst = arith.constant dense<0xFF800000> : vector<16x128xf32>
    %7 = vector.multi_reduction <maximumf>, %4, %cst [0] : vector<3x16x128xf32> to vector<16x128xf32>
    %8 = vector.shape_cast %7 : vector<16x128xf32> to vector<1x16x128xf32>
    %9 = vector.broadcast %8 : vector<1x16x128xf32> to vector<3x16x128xf32>
    %10 = arith.subf %4, %9 : vector<3x16x128xf32>
    %11 = math.exp %10 : vector<3x16x128xf32>
    %cst_7 = arith.constant dense<0.000000e+00> : vector<16x128xf32>
    %12 = vector.multi_reduction <add>, %11, %cst_7 [0] : vector<3x16x128xf32> to vector<16x128xf32>
    %13 = vector.shape_cast %12 : vector<16x128xf32> to vector<1x16x128xf32>
    %14 = tpu.reciprocal %13 {approx = true} : vector<1x16x128xf32> -> vector<1x16x128xf32>
    %15 = vector.broadcast %14 : vector<1x16x128xf32> to vector<3x16x128xf32>
    %16 = arith.mulf %11, %15 : vector<3x16x128xf32>
    %c0_i32_8 = arith.constant 0 : i32
    %17 = vector.broadcast %c0_i32_8 : i32 to vector<16x128xi32>
    %18 = arith.cmpi eq, %6, %17 : vector<16x128xi32>
    %19 = vector.extract_strided_slice %16 {offsets = [0, 0, 0], sizes = [1, 16, 128], strides = [1, 1, 1]} : vector<3x16x128xf32> to vector<1x16x128xf32>
    %20 = vector.shape_cast %19 : vector<1x16x128xf32> to vector<16x128xf32>
    %cst_9 = arith.constant 0.000000e+00 : f32
    %21 = vector.broadcast %cst_9 : f32 to vector<16x128xf32>
    %22 = arith.select %18, %20, %21 : vector<16x128xi1>, vector<16x128xf32>
    %c0_10 = arith.constant 0 : index
    %c0_11 = arith.constant 0 : index
    %c0_12 = arith.constant 0 : index
    %c0_13 = arith.constant 0 : index
    %c0_14 = arith.constant 0 : index
    %23 = vector.load %arg5[%c0_10, %c0_11, %c0_12, %c0_13, %c0_14] : memref<1x3x3x8x128xf32, #tpu.memory_space<vmem>>, vector<1x1x1x8x128xf32>
    %24 = vector.shape_cast %23 : vector<1x1x1x8x128xf32> to vector<8x128xf32>
    %25 = vector.shape_cast %22 : vector<16x128xf32> to vector<2x8x128xf32>
    %cst_15 = arith.constant dense<0.000000e+00> : vector<8x128xf32>
    %26 = vector.multi_reduction <add>, %25, %cst_15 [0] : vector<2x8x128xf32> to vector<8x128xf32>
    %27 = arith.addf %24, %26 : vector<8x128xf32>
    %c0_16 = arith.constant 0 : index
    %c0_17 = arith.constant 0 : index
    %c0_18 = arith.constant 0 : index
    %c0_19 = arith.constant 0 : index
    %c0_20 = arith.constant 0 : index
    %28 = vector.load %arg5[%c0_16, %c0_17, %c0_18, %c0_19, %c0_20] : memref<1x3x3x8x128xf32, #tpu.memory_space<vmem>>, vector<1x1x1x8x128xf32>
    %29 = vector.shape_cast %28 : vector<1x1x1x8x128xf32> to vector<8x128xf32>
    %30 = vector.shape_cast %27 : vector<8x128xf32> to vector<1x1x1x8x128xf32>
    tpu.vector_store %arg5[%c0_16, %c0_17, %c0_18, %c0_19, %c0_20], %30 {strides = array<i32>} : memref<1x3x3x8x128xf32, #tpu.memory_space<vmem>>, vector<1x1x1x8x128xf32>,
    %c0_21 = arith.constant 0 : index
    %c1 = arith.constant 1 : index
    %c0_22 = arith.constant 0 : index
    %c0_23 = arith.constant 0 : index
    %c0_24 = arith.constant 0 : index
    %31 = vector.load %arg5[%c0_21, %c1, %c0_22, %c0_23, %c0_24] : memref<1x3x3x8x128xf32, #tpu.memory_space<vmem>>, vector<1x1x1x8x128xf32>
    %32 = vector.shape_cast %31 : vector<1x1x1x8x128xf32> to vector<8x128xf32>
    %33 = vector.shape_cast %20 : vector<16x128xf32> to vector<2x8x128xf32>
    %cst_25 = arith.constant dense<0.000000e+00> : vector<8x128xf32>
    %34 = vector.multi_reduction <add>, %33, %cst_25 [0] : vector<2x8x128xf32> to vector<8x128xf32>
    %35 = arith.addf %32, %34 : vector<8x128xf32>
    %c0_26 = arith.constant 0 : index
    %c1_27 = arith.constant 1 : index
    %c0_28 = arith.constant 0 : index
    %c0_29 = arith.constant 0 : index
    %c0_30 = arith.constant 0 : index
    %36 = vector.load %arg5[%c0_26, %c1_27, %c0_28, %c0_29, %c0_30] : memref<1x3x3x8x128xf32, #tpu.memory_space<vmem>>, vector<1x1x1x8x128xf32>
    %37 = vector.shape_cast %36 : vector<1x1x1x8x128xf32> to vector<8x128xf32>
    %38 = vector.shape_cast %35 : vector<8x128xf32> to vector<1x1x1x8x128xf32>
    tpu.vector_store %arg5[%c0_26, %c1_27, %c0_28, %c0_29, %c0_30], %38 {strides = array<i32>} : memref<1x3x3x8x128xf32, #tpu.memory_space<vmem>>, vector<1x1x1x8x128xf32>,
    %c0_31 = arith.constant 0 : index
    %c2 = arith.constant 2 : index
    %c0_32 = arith.constant 0 : index
    %c0_33 = arith.constant 0 : index
    %c0_34 = arith.constant 0 : index
    %39 = vector.load %arg5[%c0_31, %c2, %c0_32, %c0_33, %c0_34] : memref<1x3x3x8x128xf32, #tpu.memory_space<vmem>>, vector<1x1x1x8x128xf32>
    %40 = vector.shape_cast %39 : vector<1x1x1x8x128xf32> to vector<8x128xf32>
    %41 = arith.extui %18 : vector<16x128xi1> to vector<16x128xi32>
    %42 = arith.sitofp %41 : vector<16x128xi32> to vector<16x128xf32>
    %43 = vector.shape_cast %42 : vector<16x128xf32> to vector<2x8x128xf32>
    %cst_35 = arith.constant dense<0.000000e+00> : vector<8x128xf32>
    %44 = vector.multi_reduction <add>, %43, %cst_35 [0] : vector<2x8x128xf32> to vector<8x128xf32>
    %45 = arith.addf %40, %44 : vector<8x128xf32>
    %c0_36 = arith.constant 0 : index
    %c2_37 = arith.constant 2 : index
    %c0_38 = arith.constant 0 : index
    %c0_39 = arith.constant 0 : index
    %c0_40 = arith.constant 0 : index
    %46 = vector.load %arg5[%c0_36, %c2_37, %c0_38, %c0_39, %c0_40] : memref<1x3x3x8x128xf32, #tpu.memory_space<vmem>>, vector<1x1x1x8x128xf32>
    %47 = vector.shape_cast %46 : vector<1x1x1x8x128xf32> to vector<8x128xf32>
    %48 = vector.shape_cast %45 : vector<8x128xf32> to vector<1x1x1x8x128xf32>
    tpu.vector_store %arg5[%c0_36, %c2_37, %c0_38, %c0_39, %c0_40], %48 {strides = array<i32>} : memref<1x3x3x8x128xf32, #tpu.memory_space<vmem>>, vector<1x1x1x8x128xf32>,
    %c1_i32 = arith.constant 1 : i32
    %49 = vector.broadcast %c1_i32 : i32 to vector<16x128xi32>
    %50 = arith.cmpi eq, %6, %49 : vector<16x128xi32>
    %51 = vector.extract_strided_slice %16 {offsets = [1, 0, 0], sizes = [1, 16, 128], strides = [1, 1, 1]} : vector<3x16x128xf32> to vector<1x16x128xf32>
    %52 = vector.shape_cast %51 : vector<1x16x128xf32> to vector<16x128xf32>
    %cst_41 = arith.constant 0.000000e+00 : f32
    %53 = vector.broadcast %cst_41 : f32 to vector<16x128xf32>
    %54 = arith.select %50, %52, %53 : vector<16x128xi1>, vector<16x128xf32>
    %c0_42 = arith.constant 0 : index
    %c0_43 = arith.constant 0 : index
    %c1_44 = arith.constant 1 : index
    %c0_45 = arith.constant 0 : index
    %c0_46 = arith.constant 0 : index
    %55 = vector.load %arg5[%c0_42, %c0_43, %c1_44, %c0_45, %c0_46] : memref<1x3x3x8x128xf32, #tpu.memory_space<vmem>>, vector<1x1x1x8x128xf32>
    %56 = vector.shape_cast %55 : vector<1x1x1x8x128xf32> to vector<8x128xf32>
    %57 = vector.shape_cast %54 : vector<16x128xf32> to vector<2x8x128xf32>
    %cst_47 = arith.constant dense<0.000000e+00> : vector<8x128xf32>
    %58 = vector.multi_reduction <add>, %57, %cst_47 [0] : vector<2x8x128xf32> to vector<8x128xf32>
    %59 = arith.addf %56, %58 : vector<8x128xf32>
    %c0_48 = arith.constant 0 : index
    %c0_49 = arith.constant 0 : index
    %c1_50 = arith.constant 1 : index
    %c0_51 = arith.constant 0 : index
    %c0_52 = arith.constant 0 : index
    %60 = vector.load %arg5[%c0_48, %c0_49, %c1_50, %c0_51, %c0_52] : memref<1x3x3x8x128xf32, #tpu.memory_space<vmem>>, vector<1x1x1x8x128xf32>
    %61 = vector.shape_cast %60 : vector<1x1x1x8x128xf32> to vector<8x128xf32>
    %62 = vector.shape_cast %59 : vector<8x128xf32> to vector<1x1x1x8x128xf32>
    tpu.vector_store %arg5[%c0_48, %c0_49, %c1_50, %c0_51, %c0_52], %62 {strides = array<i32>} : memref<1x3x3x8x128xf32, #tpu.memory_space<vmem>>, vector<1x1x1x8x128xf32>,
    %c0_53 = arith.constant 0 : index
    %c1_54 = arith.constant 1 : index
    %c1_55 = arith.constant 1 : index
    %c0_56 = arith.constant 0 : index
    %c0_57 = arith.constant 0 : index
    %63 = vector.load %arg5[%c0_53, %c1_54, %c1_55, %c0_56, %c0_57] : memref<1x3x3x8x128xf32, #tpu.memory_space<vmem>>, vector<1x1x1x8x128xf32>
    %64 = vector.shape_cast %63 : vector<1x1x1x8x128xf32> to vector<8x128xf32>
    %65 = vector.shape_cast %52 : vector<16x128xf32> to vector<2x8x128xf32>
    %cst_58 = arith.constant dense<0.000000e+00> : vector<8x128xf32>
    %66 = vector.multi_reduction <add>, %65, %cst_58 [0] : vector<2x8x128xf32> to vector<8x128xf32>
    %67 = arith.addf %64, %66 : vector<8x128xf32>
    %c0_59 = arith.constant 0 : index
    %c1_60 = arith.constant 1 : index
    %c1_61 = arith.constant 1 : index
    %c0_62 = arith.constant 0 : index
    %c0_63 = arith.constant 0 : index
    %68 = vector.load %arg5[%c0_59, %c1_60, %c1_61, %c0_62, %c0_63] : memref<1x3x3x8x128xf32, #tpu.memory_space<vmem>>, vector<1x1x1x8x128xf32>
    %69 = vector.shape_cast %68 : vector<1x1x1x8x128xf32> to vector<8x128xf32>
    %70 = vector.shape_cast %67 : vector<8x128xf32> to vector<1x1x1x8x128xf32>
    tpu.vector_store %arg5[%c0_59, %c1_60, %c1_61, %c0_62, %c0_63], %70 {strides = array<i32>} : memref<1x3x3x8x128xf32, #tpu.memory_space<vmem>>, vector<1x1x1x8x128xf32>,
    %c0_64 = arith.constant 0 : index
    %c2_65 = arith.constant 2 : index
    %c1_66 = arith.constant 1 : index
    %c0_67 = arith.constant 0 : index
    %c0_68 = arith.constant 0 : index
    %71 = vector.load %arg5[%c0_64, %c2_65, %c1_66, %c0_67, %c0_68] : memref<1x3x3x8x128xf32, #tpu.memory_space<vmem>>, vector<1x1x1x8x128xf32>
    %72 = vector.shape_cast %71 : vector<1x1x1x8x128xf32> to vector<8x128xf32>
    %73 = arith.extui %50 : vector<16x128xi1> to vector<16x128xi32>
    %74 = arith.sitofp %73 : vector<16x128xi32> to vector<16x128xf32>
    %75 = vector.shape_cast %74 : vector<16x128xf32> to vector<2x8x128xf32>
    %cst_69 = arith.constant dense<0.000000e+00> : vector<8x128xf32>
    %76 = vector.multi_reduction <add>, %75, %cst_69 [0] : vector<2x8x128xf32> to vector<8x128xf32>
    %77 = arith.addf %72, %76 : vector<8x128xf32>
    %c0_70 = arith.constant 0 : index
    %c2_71 = arith.constant 2 : index
    %c1_72 = arith.constant 1 : index
    %c0_73 = arith.constant 0 : index
    %c0_74 = arith.constant 0 : index
    %78 = vector.load %arg5[%c0_70, %c2_71, %c1_72, %c0_73, %c0_74] : memref<1x3x3x8x128xf32, #tpu.memory_space<vmem>>, vector<1x1x1x8x128xf32>
    %79 = vector.shape_cast %78 : vector<1x1x1x8x128xf32> to vector<8x128xf32>
    %80 = vector.shape_cast %77 : vector<8x128xf32> to vector<1x1x1x8x128xf32>
    tpu.vector_store %arg5[%c0_70, %c2_71, %c1_72, %c0_73, %c0_74], %80 {strides = array<i32>} : memref<1x3x3x8x128xf32, #tpu.memory_space<vmem>>, vector<1x1x1x8x128xf32>,
    %c2_i32 = arith.constant 2 : i32
    %81 = vector.broadcast %c2_i32 : i32 to vector<16x128xi32>
    %82 = arith.cmpi eq, %6, %81 : vector<16x128xi32>
    %83 = vector.extract_strided_slice %16 {offsets = [2, 0, 0], sizes = [1, 16, 128], strides = [1, 1, 1]} : vector<3x16x128xf32> to vector<1x16x128xf32>
    %84 = vector.shape_cast %83 : vector<1x16x128xf32> to vector<16x128xf32>
    %cst_75 = arith.constant 0.000000e+00 : f32
    %85 = vector.broadcast %cst_75 : f32 to vector<16x128xf32>
    %86 = arith.select %82, %84, %85 : vector<16x128xi1>, vector<16x128xf32>
    %c0_76 = arith.constant 0 : index
    %c0_77 = arith.constant 0 : index
    %c2_78 = arith.constant 2 : index
    %c0_79 = arith.constant 0 : index
    %c0_80 = arith.constant 0 : index
    %87 = vector.load %arg5[%c0_76, %c0_77, %c2_78, %c0_79, %c0_80] : memref<1x3x3x8x128xf32, #tpu.memory_space<vmem>>, vector<1x1x1x8x128xf32>
    %88 = vector.shape_cast %87 : vector<1x1x1x8x128xf32> to vector<8x128xf32>
    %89 = vector.shape_cast %86 : vector<16x128xf32> to vector<2x8x128xf32>
    %cst_81 = arith.constant dense<0.000000e+00> : vector<8x128xf32>
    %90 = vector.multi_reduction <add>, %89, %cst_81 [0] : vector<2x8x128xf32> to vector<8x128xf32>
    %91 = arith.addf %88, %90 : vector<8x128xf32>
    %c0_82 = arith.constant 0 : index
    %c0_83 = arith.constant 0 : index
    %c2_84 = arith.constant 2 : index
    %c0_85 = arith.constant 0 : index
    %c0_86 = arith.constant 0 : index
    %92 = vector.load %arg5[%c0_82, %c0_83, %c2_84, %c0_85, %c0_86] : memref<1x3x3x8x128xf32, #tpu.memory_space<vmem>>, vector<1x1x1x8x128xf32>
    %93 = vector.shape_cast %92 : vector<1x1x1x8x128xf32> to vector<8x128xf32>
    %94 = vector.shape_cast %91 : vector<8x128xf32> to vector<1x1x1x8x128xf32>
    tpu.vector_store %arg5[%c0_82, %c0_83, %c2_84, %c0_85, %c0_86], %94 {strides = array<i32>} : memref<1x3x3x8x128xf32, #tpu.memory_space<vmem>>, vector<1x1x1x8x128xf32>,
    %c0_87 = arith.constant 0 : index
    %c1_88 = arith.constant 1 : index
    %c2_89 = arith.constant 2 : index
    %c0_90 = arith.constant 0 : index
    %c0_91 = arith.constant 0 : index
    %95 = vector.load %arg5[%c0_87, %c1_88, %c2_89, %c0_90, %c0_91] : memref<1x3x3x8x128xf32, #tpu.memory_space<vmem>>, vector<1x1x1x8x128xf32>
    %96 = vector.shape_cast %95 : vector<1x1x1x8x128xf32> to vector<8x128xf32>
    %97 = vector.shape_cast %84 : vector<16x128xf32> to vector<2x8x128xf32>
    %cst_92 = arith.constant dense<0.000000e+00> : vector<8x128xf32>
    %98 = vector.multi_reduction <add>, %97, %cst_92 [0] : vector<2x8x128xf32> to vector<8x128xf32>
    %99 = arith.addf %96, %98 : vector<8x128xf32>
    %c0_93 = arith.constant 0 : index
    %c1_94 = arith.constant 1 : index
    %c2_95 = arith.constant 2 : index
    %c0_96 = arith.constant 0 : index
    %c0_97 = arith.constant 0 : index
    %100 = vector.load %arg5[%c0_93, %c1_94, %c2_95, %c0_96, %c0_97] : memref<1x3x3x8x128xf32, #tpu.memory_space<vmem>>, vector<1x1x1x8x128xf32>
    %101 = vector.shape_cast %100 : vector<1x1x1x8x128xf32> to vector<8x128xf32>
    %102 = vector.shape_cast %99 : vector<8x128xf32> to vector<1x1x1x8x128xf32>
    tpu.vector_store %arg5[%c0_93, %c1_94, %c2_95, %c0_96, %c0_97], %102 {strides = array<i32>} : memref<1x3x3x8x128xf32, #tpu.memory_space<vmem>>, vector<1x1x1x8x128xf32>,
    %c0_98 = arith.constant 0 : index
    %c2_99 = arith.constant 2 : index
    %c2_100 = arith.constant 2 : index
    %c0_101 = arith.constant 0 : index
    %c0_102 = arith.constant 0 : index
    %103 = vector.load %arg5[%c0_98, %c2_99, %c2_100, %c0_101, %c0_102] : memref<1x3x3x8x128xf32, #tpu.memory_space<vmem>>, vector<1x1x1x8x128xf32>
    %104 = vector.shape_cast %103 : vector<1x1x1x8x128xf32> to vector<8x128xf32>
    %105 = arith.extui %82 : vector<16x128xi1> to vector<16x128xi32>
    %106 = arith.sitofp %105 : vector<16x128xi32> to vector<16x128xf32>
    %107 = vector.shape_cast %106 : vector<16x128xf32> to vector<2x8x128xf32>
    %cst_103 = arith.constant dense<0.000000e+00> : vector<8x128xf32>
    %108 = vector.multi_reduction <add>, %107, %cst_103 [0] : vector<2x8x128xf32> to vector<8x128xf32>
    %109 = arith.addf %104, %108 : vector<8x128xf32>
    %c0_104 = arith.constant 0 : index
    %c2_105 = arith.constant 2 : index
    %c2_106 = arith.constant 2 : index
    %c0_107 = arith.constant 0 : index
    %c0_108 = arith.constant 0 : index
    %110 = vector.load %arg5[%c0_104, %c2_105, %c2_106, %c0_107, %c0_108] : memref<1x3x3x8x128xf32, #tpu.memory_space<vmem>>, vector<1x1x1x8x128xf32>
    %111 = vector.shape_cast %110 : vector<1x1x1x8x128xf32> to vector<8x128xf32>
    %112 = vector.shape_cast %109 : vector<8x128xf32> to vector<1x1x1x8x128xf32>
    tpu.vector_store %arg5[%c0_104, %c2_105, %c2_106, %c0_107, %c0_108], %112 {strides = array<i32>} : memref<1x3x3x8x128xf32, #tpu.memory_space<vmem>>, vector<1x1x1x8x128xf32>,
    return
  }
  func.func @transform_0(%arg0: i32, %arg1: i32, %arg2: i32) -> (i32, i32, i32, i32) {
    %c1_i32 = arith.constant 1 : i32
    %0 = arith.muli %arg0, %c1_i32 : i32
    %1 = arith.addi %0, %arg2 : i32
    %c0_i32 = arith.constant 0 : i32
    %c0_i32_0 = arith.constant 0 : i32
    %c0_i32_1 = arith.constant 0 : i32
    return %arg1, %c0_i32, %1, %c0_i32_0 : i32, i32, i32, i32
  }
  func.func @transform_1(%arg0: i32, %arg1: i32, %arg2: i32) -> (i32, i32, i32) {
    %c1_i32 = arith.constant 1 : i32
    %0 = arith.muli %arg0, %c1_i32 : i32
    %1 = arith.addi %0, %arg2 : i32
    %c0_i32 = arith.constant 0 : i32
    %c0_i32_0 = arith.constant 0 : i32
    return %arg1, %1, %c0_i32 : i32, i32, i32
  }
  func.func @transform_2(%arg0: i32, %arg1: i32, %arg2: i32) -> (i32, i32, i32, i32, i32) {
    %c2_i32 = arith.constant 2 : i32
    %0 = arith.muli %arg0, %c2_i32 : i32
    %1 = arith.addi %0, %arg1 : i32
    %c0_i32 = arith.constant 0 : i32
    %c0_i32_0 = arith.constant 0 : i32
    %c0_i32_1 = arith.constant 0 : i32
    %c0_i32_2 = arith.constant 0 : i32
    %c0_i32_3 = arith.constant 0 : i32
    return %1, %c0_i32, %c0_i32_0, %c0_i32_1, %c0_i32_2 : i32, i32, i32, i32, i32
  }
}

</mosaic_0001>

<llo_original>
// kernel: tpu_custom_call.1
$region0: #{tpu_custom_call.1}
  #allocation0 [shape = 'u32[]', space=smem, size = 0x4, offset = 0x4, fixed_abs, tag = 'smem constant byte address 0x4 - core index']
  #allocation1 [shape = 'u32[72,128]{1,0:T(1,128)}', space=vmem, size = 0x9000, scoped, tag = 'internal scratch']
  %s0 = inlined_call_operand.hbm [shape: f32[2,3,16,128], index: 0, kind: input, shape index: {}]
  %s1 = inlined_call_operand.hbm [shape: s32[2,16,128], index: 1, kind: input, shape index: {}]
  %s2 = inlined_call_operand.hbm [shape: f32[2,3,3,8,128], index: 2, kind: output, shape index: {}]
  %s3 = sld [smem:[#allocation0]]
  $region53: #{tpu_custom_call.1} parent=0
    _
  %s5 = ssub.s32 1, %s3
  %s6 = scalar_select 0, %s5, %s3
  $region1: #{tpu_custom_call.1} parent=0
    #allocation2 [shape = 'u8[49152]{0}', space=vmem, size = 0xc000, scoped, tag = 'input window, operand 0']
    #allocation3 [shape = 's32[2]{0}', space=sflag, size = 0x8, scoped, tag = 'scoped memory for tpu_custom_call.1']
    #allocation4 [shape = 's32[2]{0}', space=sflag, size = 0x8, scoped, tag = 'scoped memory for tpu_custom_call.1']
    #allocation5 [shape = 'u8[16384]{0}', space=vmem, size = 0x4000, scoped, tag = 'input window, operand 1']
    #allocation6 [shape = 's32[2]{0}', space=sflag, size = 0x8, scoped, tag = 'scoped memory for tpu_custom_call.1']
    #allocation7 [shape = 'u8[73728]{0}', space=vmem, size = 0x12000, scoped, tag = 'output window, operand 0']
    %7 = vsyncpa [#allocation3], 0
    %s8 = scalar_lea.sflag [#allocation3], 1
    %9 = vsyncpa %s8, 0
    %10 = vsyncpa [#allocation6], 0
    %s11 = scalar_lea.sflag [#allocation6], 1
    %12 = vsyncpa %s11, 0
    %13 = vsyncpa [#allocation4], 0
    %s14 = scalar_lea.sflag [#allocation4], 1
    %15 = vsyncpa %s14, 0
    loop: start=0, step=1, limit=4
    $region2: #{tpu_custom_call.1} parent=1 // loop_pre_header
      _
    $region3: #{tpu_custom_call.1} parent=1 // loop_header
      %s17 = sphi 0, %s21
      %p18 = scmp.ge.s32.totalorder %s17, 4
      %s24 = sphi 0, %s43
      %s25 = sphi 0, %s39
      %s26 = sphi 0, %s35
      %s27 = sphi 0, %s24
      %s28 = sphi 0, %s25
      %s29 = sphi 0, %s26
      %s30 = sphi 0, %s27
      %s31 = sphi 0, %s28
      %s32 = sphi 0, %s29
      %s50 = sphi 0, %s52
      %s53 = sphi 0, %s50
      %s54 = sphi 0, %s53
      %s70 = sphi 0, %s54
      %s80 = sphi 0, %s82
      %s83 = sphi 0, %s80
      %s84 = sphi 0, %s83
      %s100 = sphi 0, %s84
      %s110 = sphi 0, %s112
      %s113 = sphi 0, %s110
      %s114 = sphi 0, %s113
      %s130 = sphi 0, %s114
    $region4: #{tpu_custom_call.1} parent=1 // loop_header_branch
      %20 = sbr.rel (%p18) target = $region8
    $region5: #{tpu_custom_call.1} parent=1 // loop_body
      %s22 = ssub.s32 %s17, 1
      %s23 = ssub.s32 %s17, 2
      %s33 = sadd.s32 1, %s26
      %p34 = scmp.ge.s32.totalorder %s33, 1
      %s35 = scalar_select %p34, 0, %s33
      %s36 = sadd.s32 1, %s25
      %s37 = scalar_select %p34, %s36, %s25
      %p38 = scmp.ge.s32.totalorder %s37, 2
      %s39 = scalar_select %p38, 0, %s37
      %s40 = sadd.s32 1, %s24
      %s41 = scalar_select %p38, %s40, %s24
      %p42 = scmp.ge.s32.totalorder %s41, 1
      %s43 = scalar_select %p42, 0, %s41
      %s44 = sadd.s32 %s24, %s26
      %s45 = sadd.s32 %s43, %s35
      %s46 = ssub.s32 %s25, %s39
      %s47 = ssub.s32 %s44, %s45
      %s48 = sor.u32 %s46, %s47
      %p49 = scmp.eq.s32.totalorder %s48, 0
      %s51 = sadd.s32 %s50, 1
      %s52 = scalar_select %p49, %s50, %s51
      %p55 = pneg %p49
      %p56 = scmp.eq.s32.totalorder %s17, 1
      %p57 = por %p55, %p56
      %p58 = scmp.ne.s32.totalorder %s50, %s53
      %p59 = scmp.eq.s32.totalorder %s17, 0
      %p60 = por %p58, %p59
      %p61 = scmp.ne.s32.totalorder %s50, %s53
      %p62 = scmp.eq.s32.totalorder %s22, 1
      %p63 = por %p61, %p62
      %p64 = scmp.ne.s32.totalorder %s53, %s54
      %p65 = scmp.eq.s32.totalorder %s22, 0
      %p66 = por %p64, %p65
      %p67 = scmp.ne.s32.totalorder %s53, %s54
      %p68 = scmp.eq.s32.totalorder %s23, 1
      %p69 = por %p67, %p68
      %p71 = scmp.ne.s32.totalorder %s54, %s70
      %p72 = scmp.eq.s32.totalorder %s23, 0
      %p73 = por %p71, %p72
      %s74 = sadd.s32 %s24, %s26
      %s75 = sadd.s32 %s43, %s35
      %s76 = ssub.s32 %s25, %s39
      %s77 = ssub.s32 %s74, %s75
      %s78 = sor.u32 %s76, %s77
      %p79 = scmp.eq.s32.totalorder %s78, 0
      %s81 = sadd.s32 %s80, 1
      %s82 = scalar_select %p79, %s80, %s81
      %p85 = pneg %p79
      %p86 = scmp.eq.s32.totalorder %s17, 1
      %p87 = por %p85, %p86
      %p88 = scmp.ne.s32.totalorder %s80, %s83
      %p89 = scmp.eq.s32.totalorder %s17, 0
      %p90 = por %p88, %p89
      %p91 = scmp.ne.s32.totalorder %s80, %s83
      %p92 = scmp.eq.s32.totalorder %s22, 1
      %p93 = por %p91, %p92
      %p94 = scmp.ne.s32.totalorder %s83, %s84
      %p95 = scmp.eq.s32.totalorder %s22, 0
      %p96 = por %p94, %p95
      %p97 = scmp.ne.s32.totalorder %s83, %s84
      %p98 = scmp.eq.s32.totalorder %s23, 1
      %p99 = por %p97, %p98
      %p101 = scmp.ne.s32.totalorder %s84, %s100
      %p102 = scmp.eq.s32.totalorder %s23, 0
      %p103 = por %p101, %p102
      %s104 = smul.u32 %s24, 2
      %s105 = sadd.s32 %s104, %s25
      %s106 = smul.u32 %s43, 2
      %s107 = sadd.s32 %s106, %s39
      %s108 = ssub.s32 %s105, %s107
      %p109 = scmp.eq.s32.totalorder %s108, 0
      %s111 = sadd.s32 %s110, 1
      %s112 = scalar_select %p109, %s110, %s111
      %p115 = pneg %p109
      %p116 = scmp.eq.s32.totalorder %s17, 1
      %p117 = por %p115, %p116
      %p118 = scmp.ne.s32.totalorder %s110, %s113
      %p119 = scmp.eq.s32.totalorder %s17, 0
      %p120 = por %p118, %p119
      %p121 = scmp.ne.s32.totalorder %s110, %s113
      %p122 = scmp.eq.s32.totalorder %s22, 1
      %p123 = por %p121, %p122
      %p124 = scmp.ne.s32.totalorder %s113, %s114
      %p125 = scmp.eq.s32.totalorder %s22, 0
      %p126 = por %p124, %p125
      %p127 = scmp.ne.s32.totalorder %s113, %s114
      %p128 = scmp.eq.s32.totalorder %s23, 1
      %p129 = por %p127, %p128
      %p131 = scmp.ne.s32.totalorder %s114, %s130
      %p132 = scmp.eq.s32.totalorder %s23, 0
      %p133 = por %p131, %p132
      %p134 = scmp.le.s32.totalorder 1, %s17
      %p135 = scmp.lt.s32.totalorder %s17, 3
      %p136 = pnand %p134, %p135
      %p137 = pneg %p136
      // Predicated region
      $region9: #{tpu_custom_call.1} parent=5 // pred_check
        _
      $region10: #{tpu_custom_call.1} parent=5 // pred_check_branch
        %139 = sbr.rel (%p136) target = $region12
      $region11: #{tpu_custom_call.1} parent=5 // pred_region
        %s140 = ssub.s32 %s17, 1
      $region12: #{tpu_custom_call.1} parent=5 // pred_fallthru
        _
      %p141 = scmp.lt.s32.totalorder %s17, 2
      // Predicated region
      $region13: #{tpu_custom_call.1} parent=5 // pred_check
        %p142 = pneg %p141
      $region14: #{tpu_custom_call.1} parent=5 // pred_check_branch
        %144 = sbr.rel (%p142) target = $region16
      $region15: #{tpu_custom_call.1} parent=5 // pred_region
        // Predicated region
        $region17: #{tpu_custom_call.1} parent=15 // pred_check
          %p145 = pneg %p60
        $region18: #{tpu_custom_call.1} parent=15 // pred_check_branch
          %147 = sbr.rel (%p145) target = $region20
        $region19: #{tpu_custom_call.1} parent=15 // pred_region
          %s148 = sand.u32 %s50, 1
          %s149 = scalar_lea.sflag [#allocation3], %s148
          %s150 = sand.u32 %s50, 1
          %s151 = smul.addr %s150, 48
          %s152 = scalar_lea.vmem [#allocation2], %s151
          %s153 = sadd.s32 %s24, %s26
          %s154 = smul.u32 2, %s153
          %156 = vsyncadd %s149, 0
          %s157 = smul.addr %s25, 6
          %s158 = sadd.s32 %s154, %s157
          %s159 = smul.addr %s158, 8
          %s160 = scalar_lea.hbm %s0, %s159
          %s161 = sshll.u32 %s160, 4
          %s162 = int_to_ptr.hbm [resolvable:$true] %s161
          %s163 = sshll.u32 %s152, 4
          %s164 = int_to_ptr.vmem [resolvable:$true] %s163
          %169 = dma.hbm_to_vmem [thread:$0]  %s162, 768, %s164, %s149, 128, 128, 8
        $region20: #{tpu_custom_call.1} parent=15 // pred_fallthru
          _
        // Predicated region
        $region21: #{tpu_custom_call.1} parent=15 // pred_check
          %p170 = pneg %p90
        $region22: #{tpu_custom_call.1} parent=15 // pred_check_branch
          %172 = sbr.rel (%p170) target = $region24
        $region23: #{tpu_custom_call.1} parent=15 // pred_region
          %s173 = sand.u32 %s80, 1
          %s174 = scalar_lea.sflag [#allocation6], %s173
          %s175 = sand.u32 %s80, 1
          %s176 = smul.addr %s175, 16
          %s177 = scalar_lea.vmem [#allocation5], %s176
          %s178 = sadd.s32 %s24, %s26
          %s179 = smul.u32 2, %s178
          %181 = vsyncadd %s174, 0
          %s182 = smul.addr %s25, 2
          %s183 = sadd.s32 %s179, %s182
          %s184 = smul.addr %s183, 8
          %s185 = scalar_lea.hbm %s1, %s184
          %s186 = sshll.u32 %s185, 4
          %s187 = int_to_ptr.hbm [resolvable:$true] %s186
          %s188 = sshll.u32 %s177, 4
          %s189 = int_to_ptr.vmem [resolvable:$true] %s188
          %194 = dma.hbm_to_vmem [thread:$0]  %s187, 256, %s189, %s174, 128, 128, 8
        $region24: #{tpu_custom_call.1} parent=15 // pred_fallthru
          _
      $region16: #{tpu_custom_call.1} parent=5 // pred_fallthru
        _
      %p195 = scmp.le.s32.totalorder 1, %s17
      %p196 = scmp.lt.s32.totalorder %s17, 3
      %p197 = pnand %p195, %p196
      %p198 = pneg %p197
      // Predicated region
      $region25: #{tpu_custom_call.1} parent=5 // pred_check
        _
      $region26: #{tpu_custom_call.1} parent=5 // pred_check_branch
        %200 = sbr.rel (%p197) target = $region28
      $region27: #{tpu_custom_call.1} parent=5 // pred_region
        %s201 = ssub.s32 %s17, 1
        %s202 = sand.u32 %s53, 1
        %s203 = scalar_lea.sflag [#allocation3], %s202
        %s204 = sand.u32 %s53, 1
        %s205 = smul.addr %s204, 48
        %s206 = scalar_lea.vmem [#allocation2], %s205
        // Predicated region
        $region29: #{tpu_custom_call.1} parent=27 // pred_check
          %p207 = pneg %p66
        $region30: #{tpu_custom_call.1} parent=27 // pred_check_branch
          %209 = sbr.rel (%p207) target = $region32
        $region31: #{tpu_custom_call.1} parent=27 // pred_region
          %211 = dma.done %s203, 768
        $region32: #{tpu_custom_call.1} parent=27 // pred_fallthru
          _
        %s212 = sand.u32 %s83, 1
        %s213 = scalar_lea.sflag [#allocation6], %s212
        %s214 = sand.u32 %s83, 1
        %s215 = smul.addr %s214, 16
        %s216 = scalar_lea.vmem [#allocation5], %s215
        // Predicated region
        $region33: #{tpu_custom_call.1} parent=27 // pred_check
          %p217 = pneg %p96
        $region34: #{tpu_custom_call.1} parent=27 // pred_check_branch
          %219 = sbr.rel (%p217) target = $region36
        $region35: #{tpu_custom_call.1} parent=27 // pred_region
          %221 = dma.done %s213, 256
        $region36: #{tpu_custom_call.1} parent=27 // pred_fallthru
          _
        %s222 = sand.u32 %s53, 1
        %s223 = scalar_lea.sflag [#allocation3], %s222
        %s224 = sand.u32 %s53, 1
        %s225 = smul.addr %s224, 48
        %s226 = scalar_lea.vmem [#allocation2], %s225
        %p227 = pneg %p66
        %p228 = pneg %p63
        %s229 = sand.u32 %s83, 1
        %s230 = scalar_lea.sflag [#allocation6], %s229
        %s231 = sand.u32 %s83, 1
        %s232 = smul.addr %s231, 16
        %s233 = scalar_lea.vmem [#allocation5], %s232
        %p234 = pneg %p96
        %p235 = pneg %p93
        %p236 = pneg %p126
        %p237 = pneg %p123
        %s238 = sand.u32 %s113, 1
        %s239 = scalar_lea.sflag [#allocation4], %s238
        %s240 = sand.u32 %s113, 1
        %s241 = smul.addr %s240, 72
        %s242 = scalar_lea.vmem [#allocation7], %s241
        %s243 = sadd.s32 %s27, %s29
        %s244 = smul.u32 2, %s243
        %s245 = sadd.s32 %s27, %s29
        %s246 = smul.u32 2, %s245
        %s247 = smul.u32 %s27, 2
        %s248 = sadd.s32 %s247, %s28
        %p249 = scmp.eq.s32.totalorder %s29, 0
        // Predicated region
        $region37: #{tpu_custom_call.1} parent=27 // pred_check
          %p250 = pneg %p249
        $region38: #{tpu_custom_call.1} parent=27 // pred_check_branch
          %252 = sbr.rel (%p250) target = $region40
        $region39: #{tpu_custom_call.1} parent=27 // pred_region
          %253 = vst [vmem:[%s242] sm:$0xff] 0.0
          %254 = vst [vmem:[%s242 + $0x8] sm:$0xff] 0.0
          %255 = vst [vmem:[%s242 + $0x10] sm:$0xff] 0.0
          %256 = vst [vmem:[%s242 + $0x18] sm:$0xff] 0.0
          %257 = vst [vmem:[%s242 + $0x20] sm:$0xff] 0.0
          %258 = vst [vmem:[%s242 + $0x28] sm:$0xff] 0.0
          %259 = vst [vmem:[%s242 + $0x30] sm:$0xff] 0.0
          %260 = vst [vmem:[%s242 + $0x38] sm:$0xff] 0.0
          %261 = vst [vmem:[%s242 + $0x40] sm:$0xff] 0.0
        $region40: #{tpu_custom_call.1} parent=27 // pred_fallthru
          _
        %v262 = vld [vmem:[%s206] sm:$0xff]
        %v263 = vld [vmem:[%s206 + $0x8] sm:$0xff]
        %v264 = vld [vmem:[%s206 + $0x10] sm:$0xff]
        %v265 = vld [vmem:[%s206 + $0x18] sm:$0xff]
        %v266 = vld [vmem:[%s206 + $0x20] sm:$0xff]
        %v267 = vld [vmem:[%s206 + $0x28] sm:$0xff]
        %v268 = vld [vmem:[%s216] sm:$0xff]
        %v269 = vld [vmem:[%s216 + $0x8] sm:$0xff]
        %v270 = vmax.f32 %v262, %v266
        %v271 = vmax.f32 %v270, %v264
        %v272 = vmax.f32 %v263, %v267
        %v273 = vmax.f32 %v272, %v265
        %v274 = vsub.f32 %v262, %v271
        %v275 = vsub.f32 %v263, %v273
        %v276 = vsub.f32 %v264, %v271
        %v277 = vsub.f32 %v265, %v273
        %v278 = vsub.f32 %v266, %v271
        %v279 = vsub.f32 %v267, %v273
        %v280 = vmul.f32 %v274, 1.442695
        %v281 = vpow.pop %v280
        %v282 = vmul.f32 %v275, 1.442695
        %v283 = vpow.pop %v282
        %v284 = vmul.f32 %v276, 1.442695
        %v285 = vpow.pop %v284
        %v286 = vmul.f32 %v277, 1.442695
        %v287 = vpow.pop %v286
        %v288 = vmul.f32 %v278, 1.442695
        %v289 = vpow.pop %v288
        %v290 = vmul.f32 %v279, 1.442695
        %v291 = vpow.pop %v290
        %v292 = vadd.f32 %v281, %v285
        %v293 = vadd.f32 %v292, %v289
        %v294 = vadd.f32 %v283, %v287
        %v295 = vadd.f32 %v294, %v291
        %v296 = vrcp.pop %v293
        %v297 = vrcp.pop %v295
        %v298 = vmul.f32 %v281, %v296
        %v299 = vmul.f32 %v283, %v297
        %v300 = vmul.f32 %v285, %v296
        %v301 = vmul.f32 %v287, %v297
        %v302 = vmul.f32 %v289, %v296
        %v303 = vmul.f32 %v291, %v297
        %vm304 = vcmp.eq.s32.totalorder %v268, 0
        %vm305 = vcmp.eq.s32.totalorder %v269, 0
        %v306 = vsel %vm304, %v298, 0.0
        %v307 = vsel %vm305, %v299, 0.0
        %v308 = vld [vmem:[%s242] sm:$0xff]
        %v309 = vadd.f32 %v306, %v307
        %v310 = vadd.f32 %v308, %v309
        %311 = vst [vmem:[%s242] sm:$0xff] %v310
        %s312 = scalar_lea.vmem %s242, 24 [#allocation7]
        %v313 = vld [vmem:[%s312] sm:$0xff]
        %v314 = vadd.f32 %v298, %v299
        %v315 = vadd.f32 %v313, %v314
        %316 = vst [vmem:[%s312] sm:$0xff] %v315
        %s317 = scalar_lea.vmem %s242, 48 [#allocation7]
        %v318 = vld [vmem:[%s317] sm:$0xff]
        %v319 = vsel %vm304, 1, 0
        %v320 = vsel %vm305, 1, 0
        %v321 = vcvt.s32.f32 %v319
        %v322 = vcvt.s32.f32 %v320
        %v323 = vadd.f32 %v321, %v322
        %v324 = vadd.f32 %v318, %v323
        %325 = vst [vmem:[%s317] sm:$0xff] %v324
        %vm326 = vcmp.eq.s32.totalorder %v268, 1
        %vm327 = vcmp.eq.s32.totalorder %v269, 1
        %v328 = vsel %vm326, %v300, 0.0
        %v329 = vsel %vm327, %v301, 0.0
        %s330 = scalar_lea.vmem %s242, 8 [#allocation7]
        %v331 = vld [vmem:[%s330] sm:$0xff]
        %v332 = vadd.f32 %v328, %v329
        %v333 = vadd.f32 %v331, %v332
        %334 = vst [vmem:[%s330] sm:$0xff] %v333
        %s335 = scalar_lea.vmem %s242, 32 [#allocation7]
        %v336 = vld [vmem:[%s335] sm:$0xff]
        %v337 = vadd.f32 %v300, %v301
        %v338 = vadd.f32 %v336, %v337
        %339 = vst [vmem:[%s335] sm:$0xff] %v338
        %s340 = scalar_lea.vmem %s242, 56 [#allocation7]
        %v341 = vld [vmem:[%s340] sm:$0xff]
        %v342 = vsel %vm326, 1, 0
        %v343 = vsel %vm327, 1, 0
        %v344 = vcvt.s32.f32 %v342
        %v345 = vcvt.s32.f32 %v343
        %v346 = vadd.f32 %v344, %v345
        %v347 = vadd.f32 %v341, %v346
        %348 = vst [vmem:[%s340] sm:$0xff] %v347
        %vm349 = vcmp.eq.s32.totalorder %v268, 2
        %vm350 = vcmp.eq.s32.totalorder %v269, 2
        %v351 = vsel %vm349, %v302, 0.0
        %v352 = vsel %vm350, %v303, 0.0
        %s353 = scalar_lea.vmem %s242, 16 [#allocation7]
        %v354 = vld [vmem:[%s353] sm:$0xff]
        %v355 = vadd.f32 %v351, %v352
        %v356 = vadd.f32 %v354, %v355
        %357 = vst [vmem:[%s353] sm:$0xff] %v356
        %s358 = scalar_lea.vmem %s242, 40 [#allocation7]
        %v359 = vld [vmem:[%s358] sm:$0xff]
        %v360 = vadd.f32 %v302, %v303
        %v361 = vadd.f32 %v359, %v360
        %362 = vst [vmem:[%s358] sm:$0xff] %v361
        %s363 = scalar_lea.vmem %s242, 64 [#allocation7]
        %v364 = vld [vmem:[%s363] sm:$0xff]
        %v365 = vsel %vm349, 1, 0
        %v366 = vsel %vm350, 1, 0
        %v367 = vcvt.s32.f32 %v365
        %v368 = vcvt.s32.f32 %v366
        %v369 = vadd.f32 %v367, %v368
        %v370 = vadd.f32 %v364, %v369
        %371 = vst [vmem:[%s363] sm:$0xff] %v370
        %s372 = sand.u32 %s113, 1
        %s373 = scalar_lea.sflag [#allocation4], %s372
        %s374 = sand.u32 %s113, 1
        %s375 = smul.addr %s374, 72
        %s376 = scalar_lea.vmem [#allocation7], %s375
        // Predicated region
        $region41: #{tpu_custom_call.1} parent=27 // pred_check
          %p377 = pneg %p123
        $region42: #{tpu_custom_call.1} parent=27 // pred_check_branch
          %379 = sbr.rel (%p377) target = $region44
        $region43: #{tpu_custom_call.1} parent=27 // pred_region
          %s380 = smul.u32 %s27, 2
          %s381 = sadd.s32 %s380, %s28
          %383 = vsyncadd %s373, 0
          %s384 = smul.addr %s381, 9
          %s385 = smul.addr %s384, 8
          %s386 = scalar_lea.hbm %s2, %s385
          %s387 = sshll.u32 %s376, 4
          %s388 = int_to_ptr.vmem [resolvable:$true] %s387
          %s389 = sshll.u32 %s386, 4
          %s390 = int_to_ptr.hbm [resolvable:$true] %s389
          %395 = dma.vmem_to_hbm [thread:$0]  %s388, 1152, %s390, %s373, 128, 128, 8
        $region44: #{tpu_custom_call.1} parent=27 // pred_fallthru
          _
      $region28: #{tpu_custom_call.1} parent=5 // pred_fallthru
        _
      %p396 = scmp.le.s32.totalorder 2, %s17
      // Predicated region
      $region45: #{tpu_custom_call.1} parent=5 // pred_check
        %p397 = pneg %p396
      $region46: #{tpu_custom_call.1} parent=5 // pred_check_branch
        %399 = sbr.rel (%p397) target = $region48
      $region47: #{tpu_custom_call.1} parent=5 // pred_region
        %s400 = ssub.s32 %s17, 2
        // Predicated region
        $region49: #{tpu_custom_call.1} parent=47 // pred_check
          %p401 = pneg %p129
        $region50: #{tpu_custom_call.1} parent=47 // pred_check_branch
          %403 = sbr.rel (%p401) target = $region52
        $region51: #{tpu_custom_call.1} parent=47 // pred_region
          %s404 = sand.u32 %s114, 1
          %s405 = scalar_lea.sflag [#allocation4], %s404
          %s406 = sand.u32 %s114, 1
          %s407 = smul.addr %s406, 72
          %s408 = scalar_lea.vmem [#allocation7], %s407
          %410 = dma.done %s405, 1152
        $region52: #{tpu_custom_call.1} parent=47 // pred_fallthru
          _
      $region48: #{tpu_custom_call.1} parent=5 // pred_fallthru
        _
    $region6: #{tpu_custom_call.1} parent=1 // loop_footer
      %s21 = sadd.s32 1, %s17
    $region7: #{tpu_custom_call.1} parent=1 // loop_footer_branch
      %16 = sbr.rel target = $region3
    $region8: #{tpu_custom_call.1} parent=1 // loop_exit
      _
    %411 = vsyncpa [#allocation3], 1
    %s412 = scalar_lea.sflag [#allocation3], 1
    %413 = vsyncpa %s412, 1
    %414 = vsyncpa [#allocation6], 1
    %s415 = scalar_lea.sflag [#allocation6], 1
    %416 = vsyncpa %s415, 1
    %417 = vsyncpa [#allocation4], 1
    %s418 = scalar_lea.sflag [#allocation4], 1
    %419 = vsyncpa %s418, 1

</llo_original>
